<compile_context>
chip_gen: v5e
topology: v5e:2x2
jax: 0.10.0
libtpu: 0.0.40
codegen_flags: <defaults>
</compile_context>

<pallas_src>
import functools

import jax
import jax.numpy as jnp
from jax import lax
from jax.experimental import pallas as pl
from jax.experimental.pallas import tpu as pltpu

_LANES = 128


def _dice_kernel(pred_ref, targ_ref, inter_ref, denom_ref, *,
                 total_rows, tile_rows, chunk, acc_rows,
                 tiles_per_split, num_tiles, num_splits):
    """Accumulate per-(split, batch) partial sums over row tiles.

    Grid = (num_splits, batch, tiles_per_split); the reduction axis (row
    tiles) is last so the (acc_rows, 128) accumulators stay resident in VMEM
    across it.  All per-element arithmetic is VPU-only; the final cross-lane
    reduction happens once, on the tiny outputs, in the JAX epilogue.
    """
    s = pl.program_id(0)
    j = pl.program_id(2)
    tile_idx = s * tiles_per_split + j

    @pl.when(j == 0)
    def _():
        inter_ref[...] = jnp.zeros_like(inter_ref)
        denom_ref[...] = jnp.zeros_like(denom_ref)

    n_chunks = tile_rows // chunk

    def fold(x):
        # (chunk, 128) -> (acc_rows, 128); the reshape stays inside (8, 128)
        # tiles so it is layout-free, and the sum is plain VPU adds.
        if acc_rows == 8:
            return jnp.sum(x.reshape(chunk // 8, 8, _LANES), axis=0)
        return jnp.sum(x, axis=0, keepdims=True)

    def accumulate(masked):
        @pl.loop(0, n_chunks)
        def _(c):
            start = pl.multiple_of(c * chunk, chunk)
            p = pred_ref[pl.ds(start, chunk), :].astype(jnp.float32)
            t = targ_ref[pl.ds(start, chunk), :].astype(jnp.float32)
            if masked:
                # Only executed on the ragged last tile (see gating below).
                row = (tile_idx * tile_rows + c * chunk
                       + lax.broadcasted_iota(jnp.int32, (chunk, _LANES), 0))
                keep = row < total_rows
                p = jnp.where(keep, p, 0.0)
                t = jnp.where(keep, t, 0.0)
            inter_ref[...] += fold(p * t)
            denom_ref[...] += fold(p + t)

    ragged = (total_rows % tile_rows) != 0
    oversub = num_splits * tiles_per_split > num_tiles
    last_tile = num_tiles - 1

    if not ragged and not oversub:
        # Single fast path, no per-step predication at all.
        accumulate(False)
    else:
        # Fast unmasked path for every full tile; only the single ragged last
        # tile pays for the row mask; clamped duplicate tiles (when the split
        # axis oversubscribes num_tiles) are skipped entirely.
        @pl.when(tile_idx < last_tile)
        def _():
            accumulate(False)

        @pl.when(tile_idx == last_tile)
        def _():
            accumulate(ragged)


@functools.partial(jax.jit, static_argnames=("tile_rows",))
def dice_loss(pred, target, *, tile_rows=8192):
    """Pallas implementation of DiceLoss.forward.  Returns a float32 scalar.

    Inputs may be f32 or bf16 (any castable dtype); they are never cast or
    copied in the wrapper unless C*H*W is not a multiple of 128.
    """
    assert pred.shape == target.shape
    b = pred.shape[0]
    pf = pred.reshape(b, -1)
    tf = target.reshape(b, -1)
    n = pf.shape[1]

    pad = (-n) % _LANES
    if pad:
        # TODO(synk): non-128-aligned feature sizes pay one extra HBM copy of
        # both inputs here (jnp.pad); keep C*H*W % 128 == 0 to stay zero-copy.
        pf = jnp.pad(pf, ((0, 0), (0, pad)))
        tf = jnp.pad(tf, ((0, 0), (0, pad)))
    r = (n + pad) // _LANES                 # rows of 128 lanes per batch elem
    pf = pf.reshape(b, r, _LANES)
    tf = tf.reshape(b, r, _LANES)

    p_item = jnp.dtype(pred.dtype).itemsize
    t_item = jnp.dtype(target.dtype).itemsize
    # Packed-sublane multiple: 8 (f32), 16 (bf16), 32 (int8).
    sub = max(32 // min(p_item, t_item), 8)

    # Cap the tile so 2 inputs x 2 pipeline buffers stay within ~32 MiB VMEM
    # (8 MiB per input block), then round the tile to the sublane multiple.
    cap = (8 << 20) // (_LANES * max(p_item, t_item))
    if r >= sub:
        tr = min(tile_rows, cap, (r // sub) * sub)
    else:
        tr = r
    num_tiles = pl.cdiv(r, tr)

    # Largest power-of-two row chunk (<= 512) dividing the tile: the inner
    # loop streams (chunk, 128) slices so live ranges stay bounded and no
    # full-tile product temporary is materialized in VMEM.
    chunk = tr
    for c in (512, 256, 128, 64, 32, 16, 8):
        if tr % c == 0:
            chunk = c
            break
    acc_rows = 8 if chunk % 8 == 0 else 1

    # Megacore help for tiny / odd batches (v7x has 2 TensorCores): also split
    # the row-tile axis across a leading parallel grid dimension.
    num_splits = 2 if (b % 2 == 1 and num_tiles >= 2) else 1
    tiles_per_split = pl.cdiv(num_tiles, num_splits)

    kernel = functools.partial(
        _dice_kernel, total_rows=r, tile_rows=tr, chunk=chunk,
        acc_rows=acc_rows, tiles_per_split=tiles_per_split,
        num_tiles=num_tiles, num_splits=num_splits)

    def in_map(s, i, j):
        # Clamp duplicate tiles created by the split (they are skipped in the
        # kernel body, so re-fetching the last tile is harmless).
        return (i, jnp.minimum(s * tiles_per_split + j, num_tiles - 1), 0)

    in_spec = pl.BlockSpec((pl.Squeezed(), tr, _LANES), in_map)
    out_spec = pl.BlockSpec((pl.Squeezed(), pl.Squeezed(), acc_rows, _LANES),
                            lambda s, i, j: (s, i, 0, 0))
    out_shape = jax.ShapeDtypeStruct((num_splits, b, acc_rows, _LANES),
                                     jnp.float32)

    # 2 inputs x 2 pipeline buffers of (tr, 128) plus generous headroom; this
    # keeps the 8192-row default legal on v5e (16 MiB scoped default) while
    # staying well under v7x's 64 MiB physical VMEM.
    vmem_limit = int(2 * tr * _LANES * (p_item + t_item) + (4 << 20))
    vmem_limit = min(max(vmem_limit, 16 << 20), 48 << 20)

    cost = pl.CostEstimate(
        flops=4 * b * r * _LANES,
        transcendentals=0,
        bytes_accessed=b * r * _LANES * (p_item + t_item)
        + 2 * num_splits * b * acc_rows * _LANES * 4,
    )

    inter, denom = pl.pallas_call(
        kernel,
        out_shape=(out_shape, out_shape),
        grid_spec=pltpu.PrefetchScalarGridSpec(
            num_scalar_prefetch=0,
            grid=(num_splits, b, tiles_per_split),
            in_specs=[in_spec, in_spec],
            out_specs=[out_spec, out_spec],
        ),
        compiler_params=pltpu.CompilerParams(
            dimension_semantics=("parallel", "parallel", "arbitrary"),
            vmem_limit_bytes=vmem_limit,
        ),
        cost_estimate=cost,
    )(pf, tf)

    # Final (tiny) cross-lane reduction + dice formula in plain JAX.
    smooth = jnp.float32(1.0)
    inter_b = inter.sum(axis=(0, 2, 3))            # per-batch sum(pred*target)
    denom_b = denom.sum(axis=(0, 2, 3))            # per-batch sum(pred)+sum(target)
    dice = (2.0 * inter_b + smooth) / (denom_b + smooth)
    return (1.0 - dice.sum() / jnp.float32(b)).astype(jnp.float32)


def _dice_loss_ref(pred, target):
    """Pure-JAX reference mirroring the PyTorch module exactly."""
    smooth = 1.0
    b = pred.shape[0]
    pf = pred.reshape(b, -1).astype(jnp.float32)
    tf = target.reshape(b, -1).astype(jnp.float32)
    inter = (pf * tf).sum(axis=1)
    score = (2.0 * inter + smooth) / (pf.sum(axis=1) + tf.sum(axis=1) + smooth)
    return 1.0 - score.sum() / b


if __name__ == "__main__":
    key = jax.random.PRNGKey(0)
    k1, k2, k3, k4 = jax.random.split(key, 4)

    # Case 1: small NCHW segmentation-style shapes (f32), 128-aligned features.
    B, C, H, W = 2, 4, 16, 16
    pred = jax.nn.sigmoid(jax.random.normal(k1, (B, C, H, W), dtype=jnp.float32))
    target = (jax.random.uniform(k2, (B, C, H, W)) > 0.5).astype(jnp.float32)
    out = dice_loss(pred, target)
    jax.block_until_ready(out)
    ref = _dice_loss_ref(pred, target)
    assert jnp.allclose(out, ref, atol=1e-4, rtol=1e-4), (out, ref)

    # Case 2: batch of 1 with several row tiles -> exercises the core-split
    # parallel axis, the clamped duplicate tile and the gated ragged-tail mask
    # (96 rows of 128 lanes, tiles of 40 rows).
    pred2 = jax.nn.sigmoid(jax.random.normal(k3, (1, 3, 64, 64), dtype=jnp.float32))
    target2 = (jax.random.uniform(k4, (1, 3, 64, 64)) > 0.5).astype(jnp.float32)
    out2 = dice_loss(pred2, target2, tile_rows=40)
    jax.block_until_ready(out2)
    ref2 = _dice_loss_ref(pred2, target2)
    assert jnp.allclose(out2, ref2, atol=1e-4, rtol=1e-4), (out2, ref2)

    # Case 3: non-128-aligned feature size (pad fallback) + tiny-row path.
    pred3 = jax.nn.sigmoid(jax.random.normal(k1, (2, 3, 10, 10), dtype=jnp.float32))
    target3 = (jax.random.uniform(k2, (2, 3, 10, 10)) > 0.5).astype(jnp.float32)
    out3 = dice_loss(pred3, target3)
    jax.block_until_ready(out3)
    ref3 = _dice_loss_ref(pred3, target3)
    assert jnp.allclose(out3, ref3, atol=1e-4, rtol=1e-4), (out3, ref3)

    # Case 4: bf16 inputs accepted directly (kernel upcasts per chunk).
    out4 = dice_loss(pred.astype(jnp.bfloat16), target.astype(jnp.bfloat16))
    jax.block_until_ready(out4)
    ref4 = _dice_loss_ref(pred.astype(jnp.bfloat16), target.astype(jnp.bfloat16))
    assert jnp.allclose(out4, ref4, atol=1e-3, rtol=1e-3), (out4, ref4)

    print("KERNEL_OK")
</pallas_src>

<mosaic_0001>
module attributes {stable_mosaic.version = 11 : i64} {
  func.func @_dice_kernel(%arg0: i32, %arg1: i32, %arg2: i32, %arg3: memref<1x8x128xf32, #tpu.memory_space<vmem>>, %arg4: memref<1x8x128xf32, #tpu.memory_space<vmem>>, %arg5: memref<1x1x8x128xf32, #tpu.memory_space<vmem>>, %arg6: memref<1x1x8x128xf32, #tpu.memory_space<vmem>>) attributes {dimension_semantics = [#tpu.dimension_semantics<parallel>, #tpu.dimension_semantics<parallel>, #tpu.dimension_semantics<arbitrary>], iteration_bounds = array<i64: 1, 2, 1>, scalar_prefetch = 0 : i64, scratch_operands = 0 : i64, tpu.core_type = #tpu.core_type<tc>, window_params = [{transform_indices = @transform_0, window_bounds = array<i64: 1, 8, 128>}, {transform_indices = @transform_1, window_bounds = array<i64: 1, 8, 128>}, {transform_indices = @transform_2, window_bounds = array<i64: 1, 1, 8, 128>}, {transform_indices = @transform_3, window_bounds = array<i64: 1, 1, 8, 128>}]} {
    %c0_i32 = arith.constant 0 : i32
    %0 = arith.cmpi eq, %arg2, %c0_i32 : i32
    %1 = arith.extui %0 : i1 to i32
    %c0_i32_0 = arith.constant 0 : i32
    %2 = arith.cmpi ne, %1, %c0_i32_0 : i32
    scf.if %2 {
      %cst_24 = arith.constant 0.000000e+00 : f32
      %31 = vector.broadcast %cst_24 : f32 to vector<8x128xf32>
      %c0_25 = arith.constant 0 : index
      %c0_26 = arith.constant 0 : index
      %c0_27 = arith.constant 0 : index
      %c0_28 = arith.constant 0 : index
      %32 = vector.load %arg5[%c0_25, %c0_26, %c0_27, %c0_28] : memref<1x1x8x128xf32, #tpu.memory_space<vmem>>, vector<1x1x8x128xf32>
      %33 = vector.shape_cast %32 : vector<1x1x8x128xf32> to vector<8x128xf32>
      %34 = vector.shape_cast %31 : vector<8x128xf32> to vector<1x1x8x128xf32>
      tpu.vector_store %arg5[%c0_25, %c0_26, %c0_27, %c0_28], %34 {strides = array<i32>} : memref<1x1x8x128xf32, #tpu.memory_space<vmem>>, vector<1x1x8x128xf32>,
      %cst_29 = arith.constant 0.000000e+00 : f32
      %35 = vector.broadcast %cst_29 : f32 to vector<8x128xf32>
      %c0_30 = arith.constant 0 : index
      %c0_31 = arith.constant 0 : index
      %c0_32 = arith.constant 0 : index
      %c0_33 = arith.constant 0 : index
      %36 = vector.load %arg6[%c0_30, %c0_31, %c0_32, %c0_33] : memref<1x1x8x128xf32, #tpu.memory_space<vmem>>, vector<1x1x8x128xf32>
      %37 = vector.shape_cast %36 : vector<1x1x8x128xf32> to vector<8x128xf32>
      %38 = vector.shape_cast %35 : vector<8x128xf32> to vector<1x1x8x128xf32>
      tpu.vector_store %arg6[%c0_30, %c0_31, %c0_32, %c0_33], %38 {strides = array<i32>} : memref<1x1x8x128xf32, #tpu.memory_space<vmem>>, vector<1x1x8x128xf32>,
    } else {
    }
    %c0_i32_1 = arith.constant 0 : i32
    %c1_i32 = arith.constant 1 : i32
    %3 = arith.muli %c0_i32_1, %c1_i32 : i32
    %c0_i32_2 = arith.constant 0 : i32
    %4 = arith.addi %c0_i32_2, %3 : i32
    %c8_i32 = arith.constant 8 : i32
    %5 = arith.muli %4, %c8_i32 : i32
    %6 = tpu.assume_multiple %5, 8 : i32
    %c0 = arith.constant 0 : index
    %7 = arith.index_cast %6 : i32 to index
    %c0_3 = arith.constant 0 : index
    %8 = vector.load %arg3[%c0, %7, %c0_3] : memref<1x8x128xf32, #tpu.memory_space<vmem>>, vector<1x8x128xf32>
    %9 = vector.shape_cast %8 : vector<1x8x128xf32> to vector<8x128xf32>
    %c0_4 = arith.constant 0 : index
    %10 = arith.index_cast %6 : i32 to index
    %c0_5 = arith.constant 0 : index
    %11 = vector.load %arg4[%c0_4, %10, %c0_5] : memref<1x8x128xf32, #tpu.memory_space<vmem>>, vector<1x8x128xf32>
    %12 = vector.shape_cast %11 : vector<1x8x128xf32> to vector<8x128xf32>
    %c0_6 = arith.constant 0 : index
    %c0_7 = arith.constant 0 : index
    %c0_8 = arith.constant 0 : index
    %c0_9 = arith.constant 0 : index
    %13 = vector.load %arg5[%c0_6, %c0_7, %c0_8, %c0_9] : memref<1x1x8x128xf32, #tpu.memory_space<vmem>>, vector<1x1x8x128xf32>
    %14 = vector.shape_cast %13 : vector<1x1x8x128xf32> to vector<8x128xf32>
    %15 = arith.mulf %9, %12 : vector<8x128xf32>
    %16 = vector.shape_cast %15 : vector<8x128xf32> to vector<1x8x128xf32>
    %cst = arith.constant dense<0.000000e+00> : vector<8x128xf32>
    %17 = vector.multi_reduction <add>, %16, %cst [0] : vector<1x8x128xf32> to vector<8x128xf32>
    %18 = arith.addf %14, %17 : vector<8x128xf32>
    %c0_10 = arith.constant 0 : index
    %c0_11 = arith.constant 0 : index
    %c0_12 = arith.constant 0 : index
    %c0_13 = arith.constant 0 : index
    %19 = vector.load %arg5[%c0_10, %c0_11, %c0_12, %c0_13] : memref<1x1x8x128xf32, #tpu.memory_space<vmem>>, vector<1x1x8x128xf32>
    %20 = vector.shape_cast %19 : vector<1x1x8x128xf32> to vector<8x128xf32>
    %21 = vector.shape_cast %18 : vector<8x128xf32> to vector<1x1x8x128xf32>
    tpu.vector_store %arg5[%c0_10, %c0_11, %c0_12, %c0_13], %21 {strides = array<i32>} : memref<1x1x8x128xf32, #tpu.memory_space<vmem>>, vector<1x1x8x128xf32>,
    %c0_14 = arith.constant 0 : index
    %c0_15 = arith.constant 0 : index
    %c0_16 = arith.constant 0 : index
    %c0_17 = arith.constant 0 : index
    %22 = vector.load %arg6[%c0_14, %c0_15, %c0_16, %c0_17] : memref<1x1x8x128xf32, #tpu.memory_space<vmem>>, vector<1x1x8x128xf32>
    %23 = vector.shape_cast %22 : vector<1x1x8x128xf32> to vector<8x128xf32>
    %24 = arith.addf %9, %12 : vector<8x128xf32>
    %25 = vector.shape_cast %24 : vector<8x128xf32> to vector<1x8x128xf32>
    %cst_18 = arith.constant dense<0.000000e+00> : vector<8x128xf32>
    %26 = vector.multi_reduction <add>, %25, %cst_18 [0] : vector<1x8x128xf32> to vector<8x128xf32>
    %27 = arith.addf %23, %26 : vector<8x128xf32>
    %c0_19 = arith.constant 0 : index
    %c0_20 = arith.constant 0 : index
    %c0_21 = arith.constant 0 : index
    %c0_22 = arith.constant 0 : index
    %28 = vector.load %arg6[%c0_19, %c0_20, %c0_21, %c0_22] : memref<1x1x8x128xf32, #tpu.memory_space<vmem>>, vector<1x1x8x128xf32>
    %29 = vector.shape_cast %28 : vector<1x1x8x128xf32> to vector<8x128xf32>
    %30 = vector.shape_cast %27 : vector<8x128xf32> to vector<1x1x8x128xf32>
    tpu.vector_store %arg6[%c0_19, %c0_20, %c0_21, %c0_22], %30 {strides = array<i32>} : memref<1x1x8x128xf32, #tpu.memory_space<vmem>>, vector<1x1x8x128xf32>,
    %c1_i32_23 = arith.constant 1 : i32
    return
  }
  func.func @transform_0(%arg0: i32, %arg1: i32, %arg2: i32) -> (i32, i32, i32) {
    %c1_i32 = arith.constant 1 : i32
    %0 = arith.muli %arg0, %c1_i32 : i32
    %1 = arith.addi %0, %arg2 : i32
    %c0_i32 = arith.constant 0 : i32
    %2 = arith.minsi %1, %c0_i32 : i32
    %c0_i32_0 = arith.constant 0 : i32
    %c0_i32_1 = arith.constant 0 : i32
    return %arg1, %2, %c0_i32_0 : i32, i32, i32
  }
  func.func @transform_1(%arg0: i32, %arg1: i32, %arg2: i32) -> (i32, i32, i32) {
    %c1_i32 = arith.constant 1 : i32
    %0 = arith.muli %arg0, %c1_i32 : i32
    %1 = arith.addi %0, %arg2 : i32
    %c0_i32 = arith.constant 0 : i32
    %2 = arith.minsi %1, %c0_i32 : i32
    %c0_i32_0 = arith.constant 0 : i32
    %c0_i32_1 = arith.constant 0 : i32
    return %arg1, %2, %c0_i32_0 : i32, i32, i32
  }
  func.func @transform_2(%arg0: i32, %arg1: i32, %arg2: i32) -> (i32, i32, i32, i32) {
    %c0_i32 = arith.constant 0 : i32
    %c0_i32_0 = arith.constant 0 : i32
    %c0_i32_1 = arith.constant 0 : i32
    return %arg0, %arg1, %c0_i32, %c0_i32_0 : i32, i32, i32, i32
  }
  func.func @transform_3(%arg0: i32, %arg1: i32, %arg2: i32) -> (i32, i32, i32, i32) {
    %c0_i32 = arith.constant 0 : i32
    %c0_i32_0 = arith.constant 0 : i32
    %c0_i32_1 = arith.constant 0 : i32
    return %arg0, %arg1, %c0_i32, %c0_i32_0 : i32, i32, i32, i32
  }
}

</mosaic_0001>

<llo_original>
// kernel: dice_loss.1
$region0: #{dice_loss.1}
  #allocation0 [shape = 'u32[]', space=smem, size = 0x4, offset = 0x4, fixed_abs, tag = 'smem constant byte address 0x4 - core index']
  #allocation1 [shape = 'u32[72,128]{1,0:T(1,128)}', space=vmem, size = 0x9000, scoped, tag = 'internal scratch']
  %s0 = inlined_call_operand.vmem [shape: f32[2,8,128], index: 0, kind: input, shape index: {}]
  %s1 = inlined_call_operand.vmem [shape: f32[2,8,128], index: 1, kind: input, shape index: {}]
  %s2 = inlined_call_operand.vmem [shape: f32[1,2,8,128], index: 2, kind: output, shape index: {0}]
  %s3 = inlined_call_operand.vmem [shape: f32[1,2,8,128], index: 3, kind: output, shape index: {1}]
  %4 = xla_tuple %s2, %s3
  %s5 = sld [smem:[#allocation0]]
  $region53: #{dice_loss.1} parent=0
    _
  %s7 = ssub.s32 1, %s5
  %s8 = scalar_select 0, %s7, %s5
  loop: start=0, step=1, limit=4
  $region2: #{dice_loss.1} parent=0 // loop_pre_header
    _
  $region3: #{dice_loss.1} parent=0 // loop_header
    %s10 = sphi 0, %s14
    %p11 = scmp.ge.s32.totalorder %s10, 4
    %s17 = sphi 0, %s36
    %s18 = sphi 0, %s32
    %s19 = sphi 0, %s28
    %s20 = sphi 0, %s17
    %s21 = sphi 0, %s18
    %s22 = sphi 0, %s19
    %s23 = sphi 0, %s20
    %s24 = sphi 0, %s21
    %s25 = sphi 0, %s22
    %s47 = sphi 0, %s49
    %s50 = sphi 0, %s47
    %s51 = sphi 0, %s50
    %s67 = sphi 0, %s51
    %s81 = sphi 0, %s83
    %s84 = sphi 0, %s81
    %s85 = sphi 0, %s84
    %s101 = sphi 0, %s85
    %s109 = sphi 0, %s111
    %s112 = sphi 0, %s109
    %s113 = sphi 0, %s112
    %s129 = sphi 0, %s113
    %s137 = sphi 0, %s139
    %s140 = sphi 0, %s137
    %s141 = sphi 0, %s140
    %s157 = sphi 0, %s141
  $region4: #{dice_loss.1} parent=0 // loop_header_branch
    %13 = sbr.rel (%p11) target = $region8
  $region5: #{dice_loss.1} parent=0 // loop_body
    %s15 = ssub.s32 %s10, 1
    %s16 = ssub.s32 %s10, 2
    %s26 = sadd.s32 1, %s19
    %p27 = scmp.ge.s32.totalorder %s26, 1
    %s28 = scalar_select %p27, 0, %s26
    %s29 = sadd.s32 1, %s18
    %s30 = scalar_select %p27, %s29, %s18
    %p31 = scmp.ge.s32.totalorder %s30, 2
    %s32 = scalar_select %p31, 0, %s30
    %s33 = sadd.s32 1, %s17
    %s34 = scalar_select %p31, %s33, %s17
    %p35 = scmp.ge.s32.totalorder %s34, 1
    %s36 = scalar_select %p35, 0, %s34
    %s37 = sadd.s32 %s17, %s19
    %p38 = scmp.lt.s32.totalorder %s37, 0
    %s39 = scalar_select %p38, %s37, 0
    %s40 = sadd.s32 %s36, %s28
    %p41 = scmp.lt.s32.totalorder %s40, 0
    %s42 = scalar_select %p41, %s40, 0
    %s43 = ssub.s32 %s18, %s32
    %s44 = ssub.s32 %s39, %s42
    %s45 = sor.u32 %s43, %s44
    %p46 = scmp.eq.s32.totalorder %s45, 0
    %s48 = sadd.s32 %s47, 1
    %s49 = scalar_select %p46, %s47, %s48
    %p52 = pneg %p46
    %p53 = scmp.eq.s32.totalorder %s10, 1
    %p54 = por %p52, %p53
    %p55 = scmp.ne.s32.totalorder %s47, %s50
    %p56 = scmp.eq.s32.totalorder %s10, 0
    %p57 = por %p55, %p56
    %p58 = scmp.ne.s32.totalorder %s47, %s50
    %p59 = scmp.eq.s32.totalorder %s15, 1
    %p60 = por %p58, %p59
    %p61 = scmp.ne.s32.totalorder %s50, %s51
    %p62 = scmp.eq.s32.totalorder %s15, 0
    %p63 = por %p61, %p62
    %p64 = scmp.ne.s32.totalorder %s50, %s51
    %p65 = scmp.eq.s32.totalorder %s16, 1
    %p66 = por %p64, %p65
    %p68 = scmp.ne.s32.totalorder %s51, %s67
    %p69 = scmp.eq.s32.totalorder %s16, 0
    %p70 = por %p68, %p69
    %s71 = sadd.s32 %s17, %s19
    %p72 = scmp.lt.s32.totalorder %s71, 0
    %s73 = scalar_select %p72, %s71, 0
    %s74 = sadd.s32 %s36, %s28
    %p75 = scmp.lt.s32.totalorder %s74, 0
    %s76 = scalar_select %p75, %s74, 0
    %s77 = ssub.s32 %s18, %s32
    %s78 = ssub.s32 %s73, %s76
    %s79 = sor.u32 %s77, %s78
    %p80 = scmp.eq.s32.totalorder %s79, 0
    %s82 = sadd.s32 %s81, 1
    %s83 = scalar_select %p80, %s81, %s82
    %p86 = pneg %p80
    %p87 = scmp.eq.s32.totalorder %s10, 1
    %p88 = por %p86, %p87
    %p89 = scmp.ne.s32.totalorder %s81, %s84
    %p90 = scmp.eq.s32.totalorder %s10, 0
    %p91 = por %p89, %p90
    %p92 = scmp.ne.s32.totalorder %s81, %s84
    %p93 = scmp.eq.s32.totalorder %s15, 1
    %p94 = por %p92, %p93
    %p95 = scmp.ne.s32.totalorder %s84, %s85
    %p96 = scmp.eq.s32.totalorder %s15, 0
    %p97 = por %p95, %p96
    %p98 = scmp.ne.s32.totalorder %s84, %s85
    %p99 = scmp.eq.s32.totalorder %s16, 1
    %p100 = por %p98, %p99
    %p102 = scmp.ne.s32.totalorder %s85, %s101
    %p103 = scmp.eq.s32.totalorder %s16, 0
    %p104 = por %p102, %p103
    %s105 = ssub.s32 %s17, %s36
    %s106 = ssub.s32 %s18, %s32
    %s107 = sor.u32 %s105, %s106
    %p108 = scmp.eq.s32.totalorder %s107, 0
    %s110 = sadd.s32 %s109, 1
    %s111 = scalar_select %p108, %s109, %s110
    %p114 = pneg %p108
    %p115 = scmp.eq.s32.totalorder %s10, 1
    %p116 = por %p114, %p115
    %p117 = scmp.ne.s32.totalorder %s109, %s112
    %p118 = scmp.eq.s32.totalorder %s10, 0
    %p119 = por %p117, %p118
    %p120 = scmp.ne.s32.totalorder %s109, %s112
    %p121 = scmp.eq.s32.totalorder %s15, 1
    %p122 = por %p120, %p121
    %p123 = scmp.ne.s32.totalorder %s112, %s113
    %p124 = scmp.eq.s32.totalorder %s15, 0
    %p125 = por %p123, %p124
    %p126 = scmp.ne.s32.totalorder %s112, %s113
    %p127 = scmp.eq.s32.totalorder %s16, 1
    %p128 = por %p126, %p127
    %p130 = scmp.ne.s32.totalorder %s113, %s129
    %p131 = scmp.eq.s32.totalorder %s16, 0
    %p132 = por %p130, %p131
    %s133 = ssub.s32 %s17, %s36
    %s134 = ssub.s32 %s18, %s32
    %s135 = sor.u32 %s133, %s134
    %p136 = scmp.eq.s32.totalorder %s135, 0
    %s138 = sadd.s32 %s137, 1
    %s139 = scalar_select %p136, %s137, %s138
    %p142 = pneg %p136
    %p143 = scmp.eq.s32.totalorder %s10, 1
    %p144 = por %p142, %p143
    %p145 = scmp.ne.s32.totalorder %s137, %s140
    %p146 = scmp.eq.s32.totalorder %s10, 0
    %p147 = por %p145, %p146
    %p148 = scmp.ne.s32.totalorder %s137, %s140
    %p149 = scmp.eq.s32.totalorder %s15, 1
    %p150 = por %p148, %p149
    %p151 = scmp.ne.s32.totalorder %s140, %s141
    %p152 = scmp.eq.s32.totalorder %s15, 0
    %p153 = por %p151, %p152
    %p154 = scmp.ne.s32.totalorder %s140, %s141
    %p155 = scmp.eq.s32.totalorder %s16, 1
    %p156 = por %p154, %p155
    %p158 = scmp.ne.s32.totalorder %s141, %s157
    %p159 = scmp.eq.s32.totalorder %s16, 0
    %p160 = por %p158, %p159
    %p161 = scmp.le.s32.totalorder 1, %s10
    %p162 = scmp.lt.s32.totalorder %s10, 3
    %p163 = pnand %p161, %p162
    %p164 = pneg %p163
    // Predicated region
    $region9: #{dice_loss.1} parent=5 // pred_check
      _
    $region10: #{dice_loss.1} parent=5 // pred_check_branch
      %166 = sbr.rel (%p163) target = $region12
    $region11: #{dice_loss.1} parent=5 // pred_region
      %s167 = ssub.s32 %s10, 1
    $region12: #{dice_loss.1} parent=5 // pred_fallthru
      _
    %p168 = scmp.lt.s32.totalorder %s10, 2
    // Predicated region
    $region13: #{dice_loss.1} parent=5 // pred_check
      %p169 = pneg %p168
    $region14: #{dice_loss.1} parent=5 // pred_check_branch
      %171 = sbr.rel (%p169) target = $region16
    $region15: #{dice_loss.1} parent=5 // pred_region
      // Predicated region
      $region17: #{dice_loss.1} parent=15 // pred_check
        %p172 = pneg %p57
      $region18: #{dice_loss.1} parent=15 // pred_check_branch
        %174 = sbr.rel (%p172) target = $region20
      $region19: #{dice_loss.1} parent=15 // pred_region
        %s175 = sadd.s32 %s17, %s19
        %p176 = scmp.lt.s32.totalorder %s175, 0
        %s177 = scalar_select %p176, %s175, 0
        %p178 = scmp.lt.s32.totalorder %s18, 1
        %s179 = scalar_select %p178, %s18, 1
        %p180 = scmp.lt.s32.totalorder %s177, 0
        %s181 = scalar_select %p180, %s177, 0
        %s182 = sadd.s32 %s181, %s179
        %s183 = smul.addr %s182, 8
        %s184 = scalar_lea.vmem %s0, %s183
        %s185 = sadd.s32 %s17, %s19
        %p186 = scmp.lt.s32.totalorder %s185, 0
        %s187 = scalar_select %p186, %s185, 0
      $region20: #{dice_loss.1} parent=15 // pred_fallthru
        _
      // Predicated region
      $region21: #{dice_loss.1} parent=15 // pred_check
        %p188 = pneg %p91
      $region22: #{dice_loss.1} parent=15 // pred_check_branch
        %190 = sbr.rel (%p188) target = $region24
      $region23: #{dice_loss.1} parent=15 // pred_region
        %s191 = sadd.s32 %s17, %s19
        %p192 = scmp.lt.s32.totalorder %s191, 0
        %s193 = scalar_select %p192, %s191, 0
        %p194 = scmp.lt.s32.totalorder %s18, 1
        %s195 = scalar_select %p194, %s18, 1
        %p196 = scmp.lt.s32.totalorder %s193, 0
        %s197 = scalar_select %p196, %s193, 0
        %s198 = sadd.s32 %s197, %s195
        %s199 = smul.addr %s198, 8
        %s200 = scalar_lea.vmem %s1, %s199
        %s201 = sadd.s32 %s17, %s19
        %p202 = scmp.lt.s32.totalorder %s201, 0
        %s203 = scalar_select %p202, %s201, 0
      $region24: #{dice_loss.1} parent=15 // pred_fallthru
        _
    $region16: #{dice_loss.1} parent=5 // pred_fallthru
      _
    %p204 = scmp.le.s32.totalorder 1, %s10
    %p205 = scmp.lt.s32.totalorder %s10, 3
    %p206 = pnand %p204, %p205
    %p207 = pneg %p206
    // Predicated region
    $region25: #{dice_loss.1} parent=5 // pred_check
      _
    $region26: #{dice_loss.1} parent=5 // pred_check_branch
      %209 = sbr.rel (%p206) target = $region28
    $region27: #{dice_loss.1} parent=5 // pred_region
      %s210 = ssub.s32 %s10, 1
      %s211 = sadd.s32 %s20, %s22
      %p212 = scmp.lt.s32.totalorder %s211, 0
      %s213 = scalar_select %p212, %s211, 0
      %p214 = scmp.lt.s32.totalorder %s21, 1
      %s215 = scalar_select %p214, %s21, 1
      %p216 = scmp.lt.s32.totalorder %s213, 0
      %s217 = scalar_select %p216, %s213, 0
      %s218 = sadd.s32 %s217, %s215
      %s219 = smul.addr %s218, 8
      %s220 = scalar_lea.vmem %s0, %s219
      %p221 = pneg %p63
      %p222 = pneg %p60
      %s223 = sadd.s32 %s20, %s22
      %p224 = scmp.lt.s32.totalorder %s223, 0
      %s225 = scalar_select %p224, %s223, 0
      %p226 = scmp.lt.s32.totalorder %s21, 1
      %s227 = scalar_select %p226, %s21, 1
      %p228 = scmp.lt.s32.totalorder %s225, 0
      %s229 = scalar_select %p228, %s225, 0
      %s230 = sadd.s32 %s229, %s227
      %s231 = smul.addr %s230, 8
      %s232 = scalar_lea.vmem %s1, %s231
      %p233 = pneg %p97
      %p234 = pneg %p94
      %p235 = pneg %p125
      %p236 = pneg %p122
      %p237 = scmp.lt.s32.totalorder %s20, 0
      %s238 = scalar_select %p237, %s20, 0
      %p239 = scmp.lt.s32.totalorder %s21, 1
      %s240 = scalar_select %p239, %s21, 1
      %s241 = smul.addr %s238, 2
      %s242 = sadd.s32 %s240, %s241
      %s243 = smul.addr %s242, 8
      %s244 = scalar_lea.vmem %s2, %s243
      %p245 = pneg %p153
      %p246 = pneg %p150
      %p247 = scmp.lt.s32.totalorder %s20, 0
      %s248 = scalar_select %p247, %s20, 0
      %p249 = scmp.lt.s32.totalorder %s21, 1
      %s250 = scalar_select %p249, %s21, 1
      %s251 = smul.addr %s248, 2
      %s252 = sadd.s32 %s250, %s251
      %s253 = smul.addr %s252, 8
      %s254 = scalar_lea.vmem %s3, %s253
      %s255 = sadd.s32 %s20, %s22
      %p256 = scmp.lt.s32.totalorder %s255, 0
      %s257 = scalar_select %p256, %s255, 0
      %p258 = scmp.lt.s32.totalorder %s21, 1
      %s259 = scalar_select %p258, %s21, 1
      %p260 = scmp.lt.s32.totalorder %s257, 0
      %s261 = scalar_select %p260, %s257, 0
      %s262 = sadd.s32 %s261, %s259
      %s263 = smul.addr %s262, 8
      %s264 = scalar_lea.vmem %s0, %s263
      %s265 = sadd.s32 %s20, %s22
      %p266 = scmp.lt.s32.totalorder %s265, 0
      %s267 = scalar_select %p266, %s265, 0
      %s268 = sadd.s32 %s20, %s22
      %p269 = scmp.lt.s32.totalorder %s268, 0
      %s270 = scalar_select %p269, %s268, 0
      %p271 = scmp.lt.s32.totalorder %s21, 1
      %s272 = scalar_select %p271, %s21, 1
      %p273 = scmp.lt.s32.totalorder %s270, 0
      %s274 = scalar_select %p273, %s270, 0
      %s275 = sadd.s32 %s274, %s272
      %s276 = smul.addr %s275, 8
      %s277 = scalar_lea.vmem %s1, %s276
      %s278 = sadd.s32 %s20, %s22
      %p279 = scmp.lt.s32.totalorder %s278, 0
      %s280 = scalar_select %p279, %s278, 0
      %p281 = scmp.lt.s32.totalorder %s20, 0
      %s282 = scalar_select %p281, %s20, 0
      %p283 = scmp.lt.s32.totalorder %s21, 1
      %s284 = scalar_select %p283, %s21, 1
      %s285 = smul.addr %s282, 2
      %s286 = sadd.s32 %s284, %s285
      %s287 = smul.addr %s286, 8
      %s288 = scalar_lea.vmem %s2, %s287
      %p289 = scmp.lt.s32.totalorder %s20, 0
      %s290 = scalar_select %p289, %s20, 0
      %p291 = scmp.lt.s32.totalorder %s21, 1
      %s292 = scalar_select %p291, %s21, 1
      %s293 = smul.addr %s290, 2
      %s294 = sadd.s32 %s292, %s293
      %s295 = smul.addr %s294, 8
      %s296 = scalar_lea.vmem %s3, %s295
      %p297 = scmp.eq.s32.totalorder %s22, 0
      // Predicated region
      $region29: #{dice_loss.1} parent=27 // pred_check
        %p298 = pneg %p297
      $region30: #{dice_loss.1} parent=27 // pred_check_branch
        %300 = sbr.rel (%p298) target = $region32
      $region31: #{dice_loss.1} parent=27 // pred_region
        %301 = vst [vmem:[%s288] sm:$0xff] 0.0
        %302 = vst [vmem:[%s296] sm:$0xff] 0.0
      $region32: #{dice_loss.1} parent=27 // pred_fallthru
        _
      %v303 = vld [vmem:[%s264] sm:$0xff]
      %v304 = vld [vmem:[%s277] sm:$0xff]
      %v305 = vld [vmem:[%s288] sm:$0xff]
      %v306 = vmul.f32 %v303, %v304
      %v307 = vadd.f32 %v306, 0.0
      %v308 = vadd.f32 %v305, %v307
      %309 = vst [vmem:[%s288] sm:$0xff] %v308
      %v310 = vld [vmem:[%s296] sm:$0xff]
      %v311 = vadd.f32 %v303, %v304
      %v312 = vadd.f32 %v311, 0.0
      %v313 = vadd.f32 %v310, %v312
      %314 = vst [vmem:[%s296] sm:$0xff] %v313
      %p315 = scmp.lt.s32.totalorder %s20, 0
      %s316 = scalar_select %p315, %s20, 0
      %p317 = scmp.lt.s32.totalorder %s21, 1
      %s318 = scalar_select %p317, %s21, 1
      %s319 = smul.addr %s316, 2
      %s320 = sadd.s32 %s318, %s319
      %s321 = smul.addr %s320, 8
      %s322 = scalar_lea.vmem %s2, %s321
      %p323 = scmp.lt.s32.totalorder %s20, 0
      %s324 = scalar_select %p323, %s20, 0
      %p325 = scmp.lt.s32.totalorder %s21, 1
      %s326 = scalar_select %p325, %s21, 1
      %s327 = smul.addr %s324, 2
      %s328 = sadd.s32 %s326, %s327
      %s329 = smul.addr %s328, 8
      %s330 = scalar_lea.vmem %s3, %s329
      // Predicated region
      $region33: #{dice_loss.1} parent=27 // pred_check
        %p331 = pneg %p122
      $region34: #{dice_loss.1} parent=27 // pred_check_branch
        %333 = sbr.rel (%p331) target = $region36
      $region35: #{dice_loss.1} parent=27 // pred_region
        _
      $region36: #{dice_loss.1} parent=27 // pred_fallthru
        _
      // Predicated region
      $region37: #{dice_loss.1} parent=27 // pred_check
        %p334 = pneg %p150
      $region38: #{dice_loss.1} parent=27 // pred_check_branch
        %336 = sbr.rel (%p334) target = $region40
      $region39: #{dice_loss.1} parent=27 // pred_region
        _
      $region40: #{dice_loss.1} parent=27 // pred_fallthru
        _
    $region28: #{dice_loss.1} parent=5 // pred_fallthru
      _
    %p337 = scmp.le.s32.totalorder 2, %s10
    // Predicated region
    $region41: #{dice_loss.1} parent=5 // pred_check
      %p338 = pneg %p337
    $region42: #{dice_loss.1} parent=5 // pred_check_branch
      %340 = sbr.rel (%p338) target = $region44
    $region43: #{dice_loss.1} parent=5 // pred_region
      %s341 = ssub.s32 %s10, 2
      // Predicated region
      $region45: #{dice_loss.1} parent=43 // pred_check
        %p342 = pneg %p128
      $region46: #{dice_loss.1} parent=43 // pred_check_branch
        %344 = sbr.rel (%p342) target = $region48
      $region47: #{dice_loss.1} parent=43 // pred_region
        %p345 = scmp.lt.s32.totalorder %s23, 0
        %s346 = scalar_select %p345, %s23, 0
        %p347 = scmp.lt.s32.totalorder %s24, 1
        %s348 = scalar_select %p347, %s24, 1
        %s349 = smul.addr %s346, 2
        %s350 = sadd.s32 %s348, %s349
        %s351 = smul.addr %s350, 8
        %s352 = scalar_lea.vmem %s2, %s351
      $region48: #{dice_loss.1} parent=43 // pred_fallthru
        _
      // Predicated region
      $region49: #{dice_loss.1} parent=43 // pred_check
        %p353 = pneg %p156
      $region50: #{dice_loss.1} parent=43 // pred_check_branch
        %355 = sbr.rel (%p353) target = $region52
      $region51: #{dice_loss.1} parent=43 // pred_region
        %p356 = scmp.lt.s32.totalorder %s23, 0
        %s357 = scalar_select %p356, %s23, 0
        %p358 = scmp.lt.s32.totalorder %s24, 1
        %s359 = scalar_select %p358, %s24, 1
        %s360 = smul.addr %s357, 2
        %s361 = sadd.s32 %s359, %s360
        %s362 = smul.addr %s361, 8
        %s363 = scalar_lea.vmem %s3, %s362
      $region52: #{dice_loss.1} parent=43 // pred_fallthru
        _
    $region44: #{dice_loss.1} parent=5 // pred_fallthru
      _
  $region6: #{dice_loss.1} parent=0 // loop_footer
    %s14 = sadd.s32 1, %s10
  $region7: #{dice_loss.1} parent=0 // loop_footer_branch
    %9 = sbr.rel target = $region3
  $region8: #{dice_loss.1} parent=0 // loop_exit
    _

</llo_original>
